<compile_context>
chip_gen: v7x
topology: tpu7x:2x2x1
jax: 0.10.0
libtpu: 0.0.40
codegen_flags: <defaults>
</compile_context>

<pallas_src>
import jax
import jax.numpy as jnp
from jax.experimental import pallas as pl
from jax.experimental.pallas import tpu as pltpu

EPS = 1e-5
OUT_PAD = 8  # output lanes stored to HBM (4 real scores + 4 zero pad)


def _round_up(x, m):
    return ((x + m - 1) // m) * m


# ----------------------------------------------------------------------------
# Kernel
# ----------------------------------------------------------------------------
def graphrec_kernel(u_ref, v_ref,
                    w1u_ref, w1v_ref, w2_ref, w3_ref, w4_ref, bias_ref,
                    out_ref):
    D = u_ref.shape[1]          # embed_dim
    H = w3_ref.shape[1]         # 16
    P = out_ref.shape[1]        # OUT_PAD
    cdt = u_ref.dtype           # matmul operand dtype (bf16 or f32)

    b = bias_ref[...]           # (8, 2D) f32 packed biases
    b1 = b[0:1, :]              # (1, 2D)  fused tower bias  [b_u | b_v]
    b2 = b[1:2, :D]             # (1, D)   mid layer bias (BN3 folded)
    b3 = b[2:3, :H]             # (1, H)   w_uv2 bias (BN4 folded)
    b4 = b[3:4, :P]             # (1, P)   w_uv3 bias (zero padded)

    relu = lambda t: jnp.maximum(t, 0.0)

    def mm(x, w_ref):
        return jnp.dot(x, w_ref[...], preferred_element_type=jnp.float32)

    u = u_ref[...]
    v = v_ref[...]

    # Fused user/item towers: [x_u | x_v] in one 64-wide activation.
    # w1u has w_ur1 (BN1 folded) in cols [:D] and zeros in cols [D:];
    # w1v has w_vr1 (BN2 folded) in cols [D:] -> identical to a block-diag
    # [u|v] @ W matmul, without an in-kernel concatenate.
    h1 = relu(mm(u, w1u_ref) + mm(v, w1v_ref) + b1)          # (T, 2D) f32

    # w_ur2 / w_vr2 folded into the split w_uv1 (no nonlinearity between),
    # BN3 folded -> single (T, 2D) @ (2D, D) dot.
    h2 = relu(mm(h1.astype(cdt), w2_ref) + b2)               # (T, D)  f32

    # w_uv2 with BN4 folded.
    h3 = relu(mm(h2.astype(cdt), w3_ref) + b3)               # (T, H)  f32

    # w_uv3, output padded 4 -> 8 lanes; wrapper slices [:, :4].
    out_ref[...] = jax.nn.sigmoid(mm(h3.astype(cdt), w4_ref) + b4)


# ----------------------------------------------------------------------------
# Param preparation (plain JAX, ONCE per model): BN + linear-linear folding,
# split/zero-padded tower weights, bias packing, compute-dtype cast.
# ----------------------------------------------------------------------------
def prepare_params(p, compute_dtype=jnp.bfloat16):
    D = p["w_ur1"].shape[0]
    H = p["w_uv2"].shape[1]      # 16
    OUT = p["w_uv3"].shape[1]    # 4
    assert OUT <= OUT_PAD <= 2 * D

    def bn_scale_shift(bn):
        gamma, beta, mean, var = bn[0:1], bn[1:2], bn[2:3], bn[3:4]
        s = gamma * jax.lax.rsqrt(var + EPS)
        return s, beta - mean * s

    # BN1 / BN2 folded into the first Linears.
    s1, t1 = bn_scale_shift(p["bn1"])
    w_u1 = p["w_ur1"] * s1
    b_u1 = p["b_ur1"] * s1 + t1
    s2, t2 = bn_scale_shift(p["bn2"])
    w_v1 = p["w_vr1"] * s2
    b_v1 = p["b_vr1"] * s2 + t2

    # Split/zero-padded tower weights: u @ W1u + v @ W1v == [x_u | x_v].
    W1u = jnp.zeros((D, 2 * D), jnp.float32).at[:, :D].set(w_u1)
    W1v = jnp.zeros((D, 2 * D), jnp.float32).at[:, D:].set(w_v1)
    b1 = jnp.concatenate([b_u1, b_v1], axis=1)               # (1, 2D)

    # Fold w_ur2 -> w_uv1_u and w_vr2 -> w_uv1_v, then fold BN3; fuse into a
    # single (2D, D) weight consumed by the 64-wide activation.
    w_u2 = p["w_ur2"] @ p["w_uv1_u"]
    w_v2 = p["w_vr2"] @ p["w_uv1_v"]
    b_mid = p["b_uv1"] + p["b_ur2"] @ p["w_uv1_u"] + p["b_vr2"] @ p["w_uv1_v"]
    s3, t3 = bn_scale_shift(p["bn3"])
    W2 = jnp.concatenate([w_u2, w_v2], axis=0) * s3          # (2D, D)
    b2 = b_mid * s3 + t3

    # BN4 folded into w_uv2.
    s4, t4 = bn_scale_shift(p["bn4"])
    W3 = p["w_uv2"] * s4                                     # (D, H)
    b3 = p["b_uv2"] * s4 + t4

    # w_uv3, output padded 4 -> OUT_PAD lanes.
    W4 = jnp.zeros((H, OUT_PAD), jnp.float32).at[:, :OUT].set(p["w_uv3"])
    b4 = jnp.zeros((1, OUT_PAD), jnp.float32).at[:, :OUT].set(p["b_uv3"])

    # Pack all biases into one (8, 2D) f32 slab (single DMA, single VMEM tile).
    bias = jnp.zeros((8, 2 * D), jnp.float32)
    bias = bias.at[0, :].set(b1[0])
    bias = bias.at[1, :D].set(b2[0])
    bias = bias.at[2, :H].set(b3[0])
    bias = bias.at[3, :OUT_PAD].set(b4[0])

    cast = lambda w: w.astype(compute_dtype)
    return dict(
        w1u=cast(W1u), w1v=cast(W1v), w2=cast(W2), w3=cast(W3), w4=cast(W4),
        bias=bias, D=D, H=H, OUT=OUT, compute_dtype=jnp.dtype(compute_dtype),
    )


# ----------------------------------------------------------------------------
# Wrapper: batch-tiled pallas_call with resident weights.
# ----------------------------------------------------------------------------
def graphrec_forward(embeds_u, embeds_v, prep, *, max_tile_b=4096):
    B, D = embeds_u.shape
    assert D == prep["D"]
    cdt = prep["compute_dtype"]
    H, OUT = prep["H"], prep["OUT"]

    u = embeds_u if embeds_u.dtype == cdt else embeds_u.astype(cdt)
    v = embeds_v if embeds_v.dtype == cdt else embeds_v.astype(cdt)

    # Pad only to a multiple of 8 rows (sublane granularity); no full pad to a
    # tile multiple — the ragged tail tile is handled by Pallas edge masking.
    B8 = _round_up(B, 8)
    if B8 != B:
        u = jnp.pad(u, ((0, B8 - B), (0, 0)))
        v = jnp.pad(v, ((0, B8 - B), (0, 0)))

    # Large tiles to amortize per-grid-step overhead, but cap at ceil(B/2) so
    # the "parallel" batch axis yields >= 2 tiles (both v7x TensorCores).
    max_tile_b = max(8, (max_tile_b // 8) * 8)
    half = _round_up((B8 + 1) // 2, 8)
    TILE_B = max(8, min(max_tile_b, half))
    num_tiles = pl.cdiv(B8, TILE_B)

    act_spec = pl.BlockSpec((TILE_B, D), lambda i: (i, 0))
    res = lambda shape: pl.BlockSpec(shape, lambda i: (0, 0))  # resident weights

    dsize = jnp.dtype(cdt).itemsize
    w_elems = 2 * (D * 2 * D) + (2 * D) * D + D * H + H * OUT_PAD
    cost = pl.CostEstimate(
        flops=2 * B8 * w_elems,
        transcendentals=B8 * OUT_PAD,
        bytes_accessed=(2 * B8 * D * dsize          # u, v reads
                        + w_elems * dsize           # weights
                        + 8 * 2 * D * 4             # packed biases
                        + B8 * OUT_PAD * 4),        # output writeback
    )

    out = pl.pallas_call(
        graphrec_kernel,
        out_shape=jax.ShapeDtypeStruct((B8, OUT_PAD), jnp.float32),
        grid=(num_tiles,),
        in_specs=[
            act_spec, act_spec,
            res((D, 2 * D)), res((D, 2 * D)), res((2 * D, D)),
            res((D, H)), res((H, OUT_PAD)),
            res((8, 2 * D)),
        ],
        out_specs=pl.BlockSpec((TILE_B, OUT_PAD), lambda i: (i, 0)),
        compiler_params=pltpu.CompilerParams(
            dimension_semantics=("parallel",),
            vmem_limit_bytes=48 * 1024 * 1024),
        cost_estimate=cost,
    )(u, v, prep["w1u"], prep["w1v"], prep["w2"], prep["w3"], prep["w4"],
      prep["bias"])

    return out[:B, :OUT]


# ----------------------------------------------------------------------------
# Test params + plain-JAX reference mirroring the PyTorch module.
# ----------------------------------------------------------------------------
def make_params(key, embed_dim):
    ks = iter(jax.random.split(key, 32))

    def lin(in_f, out_f):
        w = jax.random.normal(next(ks), (in_f, out_f), jnp.float32) * 0.1
        b = jax.random.normal(next(ks), (1, out_f), jnp.float32) * 0.01
        return w, b

    def bn(feat):
        gamma = jnp.ones((1, feat), jnp.float32)
        beta = jnp.zeros((1, feat), jnp.float32)
        mean = jax.random.normal(next(ks), (1, feat), jnp.float32) * 0.05
        var = jax.random.uniform(next(ks), (1, feat), jnp.float32,
                                 minval=0.5, maxval=1.5)
        return jnp.concatenate([gamma, beta, mean, var], axis=0)  # (4, feat)

    p = {}
    p["w_ur1"], p["b_ur1"] = lin(embed_dim, embed_dim)
    p["w_ur2"], p["b_ur2"] = lin(embed_dim, embed_dim)
    p["w_vr1"], p["b_vr1"] = lin(embed_dim, embed_dim)
    p["w_vr2"], p["b_vr2"] = lin(embed_dim, embed_dim)
    w_uv1, p["b_uv1"] = lin(2 * embed_dim, embed_dim)
    p["w_uv1_u"], p["w_uv1_v"] = w_uv1[:embed_dim], w_uv1[embed_dim:]
    p["w_uv2"], p["b_uv2"] = lin(embed_dim, 16)
    p["w_uv3"], p["b_uv3"] = lin(16, 4)
    p["bn1"], p["bn2"], p["bn3"] = bn(embed_dim), bn(embed_dim), bn(embed_dim)
    p["bn4"] = bn(16)
    return p


def reference_forward(embeds_u, embeds_v, p):
    def bnorm(x, bp):
        gamma, beta, mean, var = bp[0:1], bp[1:2], bp[2:3], bp[3:4]
        return (x - mean) / jnp.sqrt(var + EPS) * gamma + beta

    relu = lambda t: jnp.maximum(t, 0.0)
    x_u = relu(bnorm(embeds_u @ p["w_ur1"] + p["b_ur1"], p["bn1"]))
    x_u = x_u @ p["w_ur2"] + p["b_ur2"]
    x_v = relu(bnorm(embeds_v @ p["w_vr1"] + p["b_vr1"], p["bn2"]))
    x_v = x_v @ p["w_vr2"] + p["b_vr2"]
    x_uv = jnp.concatenate([x_u, x_v], axis=1)
    w_uv1 = jnp.concatenate([p["w_uv1_u"], p["w_uv1_v"]], axis=0)
    x = relu(bnorm(x_uv @ w_uv1 + p["b_uv1"], p["bn3"]))
    x = relu(bnorm(x @ p["w_uv2"] + p["b_uv2"], p["bn4"]))
    return jax.nn.sigmoid(x @ p["w_uv3"] + p["b_uv3"])


if __name__ == "__main__":
    key = jax.random.PRNGKey(0)
    k_emb_u, k_emb_v, k_params, k_nu, k_nv, k_nu2, k_nv2 = jax.random.split(key, 7)

    embed_dim = 32
    num_users, num_items = 20, 30
    batch = 8

    # enc_u / enc_v_history modeled as deterministic embedding tables (JAX glue).
    u_table = jax.random.normal(k_emb_u, (num_users, embed_dim), jnp.float32)
    v_table = jax.random.normal(k_emb_v, (num_items, embed_dim), jnp.float32)
    nodes_u = jax.random.randint(k_nu, (batch,), 0, num_users)
    nodes_v = jax.random.randint(k_nv, (batch,), 0, num_items)

    embeds_u = u_table[nodes_u]   # (batch, embed_dim)
    embeds_v = v_table[nodes_v]   # (batch, embed_dim)

    params = make_params(k_params, embed_dim)
    ref = reference_forward(embeds_u, embeds_v, params)

    # f32 matmul path (tight numerical check vs. the unfolded reference).
    prep_f32 = prepare_params(params, compute_dtype=jnp.float32)
    scores = graphrec_forward(embeds_u, embeds_v, prep_f32)
    scores = jax.block_until_ready(scores)
    assert scores.shape == (batch, 4)
    assert jnp.allclose(scores, ref, atol=1e-4, rtol=1e-4), (scores, ref)

    # bf16 matmul operands (default / MXU fast path), f32 accumulation.
    prep_bf16 = prepare_params(params)   # compute_dtype=bf16 by default
    scores_bf16 = graphrec_forward(embeds_u, embeds_v, prep_bf16)
    scores_bf16 = jax.block_until_ready(scores_bf16)
    assert jnp.allclose(scores_bf16, ref, atol=5e-2, rtol=5e-2), (scores_bf16, ref)

    # Larger batch that exercises the multi-tile grid, the pad-to-8 path and
    # the ragged tail tile (no host-side full padding any more).
    batch2 = 100
    nodes_u2 = jax.random.randint(k_nu2, (batch2,), 0, num_users)
    nodes_v2 = jax.random.randint(k_nv2, (batch2,), 0, num_items)
    eu2, ev2 = u_table[nodes_u2], v_table[nodes_v2]
    ref2 = reference_forward(eu2, ev2, params)
    scores2 = jax.block_until_ready(graphrec_forward(eu2, ev2, prep_f32))
    assert scores2.shape == (batch2, 4)
    assert jnp.allclose(scores2, ref2, atol=1e-4, rtol=1e-4), (scores2, ref2)

    # TODO(synk): enc_u / enc_v_history are external aggregation encoders in the
    # original repo; modeled here as embedding lookups (done in JAX glue).
    print("KERNEL_OK")
</pallas_src>

<mosaic_0001>
module attributes {stable_mosaic.version = 11 : i64} {
  func.func @graphrec_kernel(%arg0: i32, %arg1: memref<8x32xf32, #tpu.memory_space<vmem>>, %arg2: memref<8x32xf32, #tpu.memory_space<vmem>>, %arg3: memref<32x64xf32, #tpu.memory_space<vmem>>, %arg4: memref<32x64xf32, #tpu.memory_space<vmem>>, %arg5: memref<64x32xf32, #tpu.memory_space<vmem>>, %arg6: memref<32x16xf32, #tpu.memory_space<vmem>>, %arg7: memref<16x8xf32, #tpu.memory_space<vmem>>, %arg8: memref<8x64xf32, #tpu.memory_space<vmem>>, %arg9: memref<8x8xf32, #tpu.memory_space<vmem>>) attributes {dimension_semantics = [#tpu.dimension_semantics<parallel>], iteration_bounds = array<i64: 1>, scalar_prefetch = 0 : i64, scratch_operands = 0 : i64, tpu.core_type = #tpu.core_type<tc>, window_params = [{transform_indices = @transform_0, window_bounds = array<i64: 8, 32>}, {transform_indices = @transform_1, window_bounds = array<i64: 8, 32>}, {pipeline_mode = #tpu.pipeline_mode<synchronous>, transform_indices = @transform_2, window_bounds = array<i64: 32, 64>}, {pipeline_mode = #tpu.pipeline_mode<synchronous>, transform_indices = @transform_3, window_bounds = array<i64: 32, 64>}, {pipeline_mode = #tpu.pipeline_mode<synchronous>, transform_indices = @transform_4, window_bounds = array<i64: 64, 32>}, {pipeline_mode = #tpu.pipeline_mode<synchronous>, transform_indices = @transform_5, window_bounds = array<i64: 32, 16>}, {pipeline_mode = #tpu.pipeline_mode<synchronous>, transform_indices = @transform_6, window_bounds = array<i64: 16, 8>}, {pipeline_mode = #tpu.pipeline_mode<synchronous>, transform_indices = @transform_7, window_bounds = array<i64: 8, 64>}, {transform_indices = @transform_8, window_bounds = array<i64: 8, 8>}]} {
    %c0 = arith.constant 0 : index
    %c0_0 = arith.constant 0 : index
    %0 = vector.load %arg8[%c0, %c0_0] : memref<8x64xf32, #tpu.memory_space<vmem>>, vector<8x64xf32>
    %1 = vector.extract_strided_slice %0 {offsets = [0, 0], sizes = [1, 64], strides = [1, 1]} : vector<8x64xf32> to vector<1x64xf32>
    %2 = vector.extract_strided_slice %0 {offsets = [1, 0], sizes = [1, 32], strides = [1, 1]} : vector<8x64xf32> to vector<1x32xf32>
    %3 = vector.extract_strided_slice %0 {offsets = [2, 0], sizes = [1, 16], strides = [1, 1]} : vector<8x64xf32> to vector<1x16xf32>
    %4 = vector.extract_strided_slice %0 {offsets = [3, 0], sizes = [1, 8], strides = [1, 1]} : vector<8x64xf32> to vector<1x8xf32>
    %c0_1 = arith.constant 0 : index
    %c0_2 = arith.constant 0 : index
    %5 = vector.load %arg1[%c0_1, %c0_2] : memref<8x32xf32, #tpu.memory_space<vmem>>, vector<8x32xf32>
    %c0_3 = arith.constant 0 : index
    %c0_4 = arith.constant 0 : index
    %6 = vector.load %arg2[%c0_3, %c0_4] : memref<8x32xf32, #tpu.memory_space<vmem>>, vector<8x32xf32>
    %c0_5 = arith.constant 0 : index
    %c0_6 = arith.constant 0 : index
    %7 = vector.load %arg3[%c0_5, %c0_6] : memref<32x64xf32, #tpu.memory_space<vmem>>, vector<32x64xf32>
    %cst = arith.constant dense<0.000000e+00> : vector<8x64xf32>
    %8 = tpu.matmul %5, %7, %cst {dimension_numbers = #tpu.dot_dimension_numbers<[1], [0], [0], [1], [0, 0, 1, 1], [], []>} : vector<8x32xf32>, vector<32x64xf32>, vector<8x64xf32> -> vector<8x64xf32>
    %c0_7 = arith.constant 0 : index
    %c0_8 = arith.constant 0 : index
    %9 = vector.load %arg4[%c0_7, %c0_8] : memref<32x64xf32, #tpu.memory_space<vmem>>, vector<32x64xf32>
    %cst_9 = arith.constant dense<0.000000e+00> : vector<8x64xf32>
    %10 = tpu.matmul %6, %9, %cst_9 {dimension_numbers = #tpu.dot_dimension_numbers<[1], [0], [0], [1], [0, 0, 1, 1], [], []>} : vector<8x32xf32>, vector<32x64xf32>, vector<8x64xf32> -> vector<8x64xf32>
    %11 = arith.addf %8, %10 : vector<8x64xf32>
    %12 = vector.broadcast %1 : vector<1x64xf32> to vector<8x64xf32>
    %13 = arith.addf %11, %12 : vector<8x64xf32>
    %cst_10 = arith.constant 0.000000e+00 : f32
    %14 = vector.broadcast %cst_10 : f32 to vector<8x64xf32>
    %15 = arith.maximumf %13, %14 : vector<8x64xf32>
    %c0_11 = arith.constant 0 : index
    %c0_12 = arith.constant 0 : index
    %16 = vector.load %arg5[%c0_11, %c0_12] : memref<64x32xf32, #tpu.memory_space<vmem>>, vector<64x32xf32>
    %cst_13 = arith.constant dense<0.000000e+00> : vector<8x32xf32>
    %17 = tpu.matmul %15, %16, %cst_13 {dimension_numbers = #tpu.dot_dimension_numbers<[1], [0], [0], [1], [0, 0, 1, 1], [], []>} : vector<8x64xf32>, vector<64x32xf32>, vector<8x32xf32> -> vector<8x32xf32>
    %18 = vector.broadcast %2 : vector<1x32xf32> to vector<8x32xf32>
    %19 = arith.addf %17, %18 : vector<8x32xf32>
    %cst_14 = arith.constant 0.000000e+00 : f32
    %20 = vector.broadcast %cst_14 : f32 to vector<8x32xf32>
    %21 = arith.maximumf %19, %20 : vector<8x32xf32>
    %c0_15 = arith.constant 0 : index
    %c0_16 = arith.constant 0 : index
    %22 = vector.load %arg6[%c0_15, %c0_16] : memref<32x16xf32, #tpu.memory_space<vmem>>, vector<32x16xf32>
    %cst_17 = arith.constant dense<0.000000e+00> : vector<8x16xf32>
    %23 = tpu.matmul %21, %22, %cst_17 {dimension_numbers = #tpu.dot_dimension_numbers<[1], [0], [0], [1], [0, 0, 1, 1], [], []>} : vector<8x32xf32>, vector<32x16xf32>, vector<8x16xf32> -> vector<8x16xf32>
    %24 = vector.broadcast %3 : vector<1x16xf32> to vector<8x16xf32>
    %25 = arith.addf %23, %24 : vector<8x16xf32>
    %cst_18 = arith.constant 0.000000e+00 : f32
    %26 = vector.broadcast %cst_18 : f32 to vector<8x16xf32>
    %27 = arith.maximumf %25, %26 : vector<8x16xf32>
    %c0_19 = arith.constant 0 : index
    %c0_20 = arith.constant 0 : index
    %28 = vector.load %arg7[%c0_19, %c0_20] : memref<16x8xf32, #tpu.memory_space<vmem>>, vector<16x8xf32>
    %cst_21 = arith.constant dense<0.000000e+00> : vector<8x8xf32>
    %29 = tpu.matmul %27, %28, %cst_21 {dimension_numbers = #tpu.dot_dimension_numbers<[1], [0], [0], [1], [0, 0, 1, 1], [], []>} : vector<8x16xf32>, vector<16x8xf32>, vector<8x8xf32> -> vector<8x8xf32>
    %30 = vector.broadcast %4 : vector<1x8xf32> to vector<8x8xf32>
    %31 = arith.addf %29, %30 : vector<8x8xf32>
    %32 = arith.negf %31 : vector<8x8xf32>
    %33 = math.exp %32 : vector<8x8xf32>
    %cst_22 = arith.constant 1.000000e+00 : f32
    %34 = vector.broadcast %cst_22 : f32 to vector<8x8xf32>
    %35 = arith.addf %34, %33 : vector<8x8xf32>
    %36 = arith.divf %34, %35 : vector<8x8xf32>
    %c0_23 = arith.constant 0 : index
    %c0_24 = arith.constant 0 : index
    %37 = vector.load %arg9[%c0_23, %c0_24] : memref<8x8xf32, #tpu.memory_space<vmem>>, vector<8x8xf32>
    tpu.vector_store %arg9[%c0_23, %c0_24], %36 {strides = array<i32>} : memref<8x8xf32, #tpu.memory_space<vmem>>, vector<8x8xf32>,
    return
  }
  func.func @transform_0(%arg0: i32) -> (i32, i32) {
    %c0_i32 = arith.constant 0 : i32
    %c0_i32_0 = arith.constant 0 : i32
    return %arg0, %c0_i32 : i32, i32
  }
  func.func @transform_1(%arg0: i32) -> (i32, i32) {
    %c0_i32 = arith.constant 0 : i32
    %c0_i32_0 = arith.constant 0 : i32
    return %arg0, %c0_i32 : i32, i32
  }
  func.func @transform_2(%arg0: i32) -> (i32, i32) {
    %c0_i32 = arith.constant 0 : i32
    %c0_i32_0 = arith.constant 0 : i32
    %c0_i32_1 = arith.constant 0 : i32
    return %c0_i32, %c0_i32_0 : i32, i32
  }
  func.func @transform_3(%arg0: i32) -> (i32, i32) {
    %c0_i32 = arith.constant 0 : i32
    %c0_i32_0 = arith.constant 0 : i32
    %c0_i32_1 = arith.constant 0 : i32
    return %c0_i32, %c0_i32_0 : i32, i32
  }
  func.func @transform_4(%arg0: i32) -> (i32, i32) {
    %c0_i32 = arith.constant 0 : i32
    %c0_i32_0 = arith.constant 0 : i32
    %c0_i32_1 = arith.constant 0 : i32
    return %c0_i32, %c0_i32_0 : i32, i32
  }
  func.func @transform_5(%arg0: i32) -> (i32, i32) {
    %c0_i32 = arith.constant 0 : i32
    %c0_i32_0 = arith.constant 0 : i32
    %c0_i32_1 = arith.constant 0 : i32
    return %c0_i32, %c0_i32_0 : i32, i32
  }
  func.func @transform_6(%arg0: i32) -> (i32, i32) {
    %c0_i32 = arith.constant 0 : i32
    %c0_i32_0 = arith.constant 0 : i32
    %c0_i32_1 = arith.constant 0 : i32
    return %c0_i32, %c0_i32_0 : i32, i32
  }
  func.func @transform_7(%arg0: i32) -> (i32, i32) {
    %c0_i32 = arith.constant 0 : i32
    %c0_i32_0 = arith.constant 0 : i32
    %c0_i32_1 = arith.constant 0 : i32
    return %c0_i32, %c0_i32_0 : i32, i32
  }
  func.func @transform_8(%arg0: i32) -> (i32, i32) {
    %c0_i32 = arith.constant 0 : i32
    %c0_i32_0 = arith.constant 0 : i32
    return %arg0, %c0_i32 : i32, i32
  }
}

</mosaic_0001>

<llo_original>
// kernel: tpu_custom_call.1
$region0: #{tpu_custom_call.1}
  #allocation0 [shape = 'u32[]', space=smem, size = 0x4, offset = 0x4, fixed_abs, tag = 'smem constant byte address 0x4 - core index']
  #allocation1 [shape = 'u32[144,128]{1,0:T(1,128)}', space=vmem, size = 0x12000, scoped, tag = 'internal scratch']
  %s0 = inlined_call_operand.vmem [shape: f32[8,32], index: 0, kind: input, shape index: {}]
  %s1 = inlined_call_operand.vmem [shape: f32[8,32], index: 1, kind: input, shape index: {}]
  %s2 = inlined_call_operand.vmem [shape: f32[32,64], index: 2, kind: input, shape index: {}]
  %s3 = inlined_call_operand.vmem [shape: f32[32,64], index: 3, kind: input, shape index: {}]
  %s4 = inlined_call_operand.vmem [shape: f32[64,32], index: 4, kind: input, shape index: {}]
  %s5 = inlined_call_operand.vmem [shape: f32[32,16], index: 5, kind: input, shape index: {}]
  %s6 = inlined_call_operand.vmem [shape: f32[16,8], index: 6, kind: input, shape index: {}]
  %s7 = inlined_call_operand.vmem [shape: f32[8,64], index: 7, kind: input, shape index: {}]
  %s8 = inlined_call_operand.hbm [shape: f32[8,8], index: 8, kind: output, shape index: {}]
  %s9 = sld [smem:[#allocation0]]
  $region42: #{tpu_custom_call.1} parent=0
    _
  %s11 = ssub.s32 1, %s9
  %s12 = scalar_select 0, %s11, %s9
  $region1: #{tpu_custom_call.1} parent=0
    #allocation2 [shape = 'u8[4096]{0}', space=vmem, size = 0x1000, scoped, tag = 'output window, operand 0, single buffered']
    #allocation3 [shape = 's32[1]{0}', space=sflag, size = 0x4, scoped, tag = 'scoped memory for tpu_custom_call.1']
    %13 = vsyncpa [#allocation3], 0
    // Predicated region
    $region2: #{tpu_custom_call.1} parent=1 // pred_check
      _
    $region3: #{tpu_custom_call.1} parent=1 // pred_check_branch
      %15 = sbr.rel (0) target = $region5
    $region4: #{tpu_custom_call.1} parent=1 // pred_region
      _
    $region5: #{tpu_custom_call.1} parent=1 // pred_fallthru
      _
    // Predicated region
    $region6: #{tpu_custom_call.1} parent=1 // pred_check
      _
    $region7: #{tpu_custom_call.1} parent=1 // pred_check_branch
      %17 = sbr.rel (0) target = $region9
    $region8: #{tpu_custom_call.1} parent=1 // pred_region
      _
    $region9: #{tpu_custom_call.1} parent=1 // pred_fallthru
      _
    // Predicated region
    $region10: #{tpu_custom_call.1} parent=1 // pred_check
      _
    $region11: #{tpu_custom_call.1} parent=1 // pred_check_branch
      %19 = sbr.rel (0) target = $region13
    $region12: #{tpu_custom_call.1} parent=1 // pred_region
      _
    $region13: #{tpu_custom_call.1} parent=1 // pred_fallthru
      _
    // Predicated region
    $region14: #{tpu_custom_call.1} parent=1 // pred_check
      _
    $region15: #{tpu_custom_call.1} parent=1 // pred_check_branch
      %21 = sbr.rel (0) target = $region17
    $region16: #{tpu_custom_call.1} parent=1 // pred_region
      _
    $region17: #{tpu_custom_call.1} parent=1 // pred_fallthru
      _
    // Predicated region
    $region18: #{tpu_custom_call.1} parent=1 // pred_check
      _
    $region19: #{tpu_custom_call.1} parent=1 // pred_check_branch
      %23 = sbr.rel (0) target = $region21
    $region20: #{tpu_custom_call.1} parent=1 // pred_region
      _
    $region21: #{tpu_custom_call.1} parent=1 // pred_fallthru
      _
    // Predicated region
    $region22: #{tpu_custom_call.1} parent=1 // pred_check
      _
    $region23: #{tpu_custom_call.1} parent=1 // pred_check_branch
      %25 = sbr.rel (0) target = $region25
    $region24: #{tpu_custom_call.1} parent=1 // pred_region
      _
    $region25: #{tpu_custom_call.1} parent=1 // pred_fallthru
      _
    // Predicated region
    $region26: #{tpu_custom_call.1} parent=1 // pred_check
      _
    $region27: #{tpu_custom_call.1} parent=1 // pred_check_branch
      %27 = sbr.rel (0) target = $region29
    $region28: #{tpu_custom_call.1} parent=1 // pred_region
      _
    $region29: #{tpu_custom_call.1} parent=1 // pred_fallthru
      _
    // Predicated region
    $region30: #{tpu_custom_call.1} parent=1 // pred_check
      _
    $region31: #{tpu_custom_call.1} parent=1 // pred_check_branch
      %29 = sbr.rel (0) target = $region33
    $region32: #{tpu_custom_call.1} parent=1 // pred_region
      _
    $region33: #{tpu_custom_call.1} parent=1 // pred_fallthru
      _
    %v30 = vld [vmem:[%s7] sm:$0xff]
    %v31 = vld [vmem:[%s0] sm:$0xff]
    %v32 = vld [vmem:[%s1] sm:$0xff]
    %v33 = vld [vmem:[%s2] sm:$0xff]
    %v34 = vld [vmem:[%s2 + $0x8] sm:$0xff]
    %v35 = vld [vmem:[%s2 + $0x10] sm:$0xff]
    %v36 = vld [vmem:[%s2 + $0x18] sm:$0xff]
    %v37 = vld [vmem:[%s3] sm:$0xff]
    %v38 = vld [vmem:[%s3 + $0x8] sm:$0xff]
    %v39 = vld [vmem:[%s3 + $0x10] sm:$0xff]
    %v40 = vld [vmem:[%s3 + $0x18] sm:$0xff]
    %vm41 = vcmask 261120
    %v43 = vsel %vm41, %v32, 0
    %45 = vmatprep.subr.mxu0 0.0
    %46 = vmatpush1.msra.mxu0 %v37
    %47 = vmatprep.subr.mxu0 0.0
    %48 = vmatpush1.msra.mxu0 %v38
    %49 = vmatprep.subr.mxu0 0.0
    %50 = vmatpush1.msra.mxu0 %v39
    %51 = vmatprep.subr.mxu0 0.0
    %52 = vmatpush1.msra.mxu0 %v40
    %53 = vmatprep.subr.mxu0 0.0
    %54 = vmatpush1.msra.mxu0 0.0
    %55 = vmatprep.subr.mxu0 0.0
    %56 = vmatpush1.msra.mxu0 0.0
    %57 = vmatprep.subr.mxu0 0.0
    %58 = vmatpush1.msra.mxu0 0.0
    %59 = vmatprep.subr.mxu0 0.0
    %60 = vmatpush1.msra.mxu0 0.0
    %61 = vmatprep.subr.mxu0 0.0
    %62 = vmatpush1.msra.mxu0 0.0
    %63 = vmatprep.subr.mxu0 0.0
    %64 = vmatpush1.msra.mxu0 0.0
    %65 = vmatprep.subr.mxu0 0.0
    %66 = vmatpush1.msra.mxu0 0.0
    %67 = vmatprep.subr.mxu0 0.0
    %68 = vmatpush1.msra.mxu0 0.0
    %69 = vmatprep.subr.mxu0 0.0
    %70 = vmatpush1.msra.mxu0 0.0
    %71 = vmatprep.subr.mxu0 0.0
    %72 = vmatpush1.msra.mxu0 0.0
    %73 = vmatprep.subr.mxu0 0.0
    %74 = vmatpush1.msra.mxu0 0.0
    %75 = vmatprep.subr.mxu0 0.0
    %76 = vmatpush1.msra.mxu0 0.0
    %77 = vmatprep.subr.mxu0 0.0
    %78 = vmatpush1.msra.mxu0 0.0
    %79 = vmatprep.subr.mxu0 0.0
    %80 = vmatpush1.msra.mxu0 0.0
    %81 = vmatprep.subr.mxu0 0.0
    %82 = vmatpush1.msra.mxu0 0.0
    %83 = vmatprep.subr.mxu0 0.0
    %84 = vmatpush1.msra.mxu0 0.0
    %85 = vmatprep.subr.mxu0 0.0
    %86 = vmatpush1.msra.mxu0 0.0
    %87 = vmatprep.subr.mxu0 0.0
    %88 = vmatpush1.msra.mxu0 0.0
    %89 = vmatprep.subr.mxu0 0.0
    %90 = vmatpush1.msra.mxu0 0.0
    %91 = vmatprep.subr.mxu0 0.0
    %92 = vmatpush1.msra.mxu0 0.0
    %93 = vmatprep.subr.mxu0 0.0
    %94 = vmatpush1.msra.mxu0 0.0
    %95 = vmatprep.subr.mxu0 0.0
    %96 = vmatpush1.msra.mxu0 0.0
    %97 = vmatprep.subr.mxu0 0.0
    %98 = vmatpush1.msra.mxu0 0.0
    %99 = vmatprep.subr.mxu0 0.0
    %100 = vmatpush1.msra.mxu0 0.0
    %101 = vmatprep.subr.mxu0 0.0
    %102 = vmatpush1.msra.mxu0 0.0
    %103 = vmatprep.subr.mxu0 0.0
    %104 = vmatpush1.msra.mxu0 0.0
    %105 = vmatprep.subr.mxu0 0.0
    %106 = vmatpush1.msra.mxu0 0.0
    %107 = vmatprep.subr.mxu0 0.0
    %108 = vmatpush1.msra.mxu0 0.0
    %109 = vmatprep.mubr.f32.mxu0 0.0
    %110 = vmatmul.mubr.f32.gmra.mrb[0].mxu0 %v43
    %v111 = vpop.f32.mrb[0].mxu0
    %v112 = vadd.f32 0.0, %v111
    %v113 = vpop.f32.mrb[0].mxu0
    %114 = vdwg.mxu0
    %v116 = vsel %vm41, %v31, 0
    %118 = vmatprep.subr.mxu0 0.0
    %119 = vmatpush1.msra.mxu0 %v33
    %120 = vmatprep.subr.mxu0 0.0
    %121 = vmatpush1.msra.mxu0 %v34
    %122 = vmatprep.subr.mxu0 0.0
    %123 = vmatpush1.msra.mxu0 %v35
    %124 = vmatprep.subr.mxu0 0.0
    %125 = vmatpush1.msra.mxu0 %v36
    %126 = vmatprep.subr.mxu0 0.0
    %127 = vmatpush1.msra.mxu0 0.0
    %128 = vmatprep.subr.mxu0 0.0
    %129 = vmatpush1.msra.mxu0 0.0
    %130 = vmatprep.subr.mxu0 0.0
    %131 = vmatpush1.msra.mxu0 0.0
    %132 = vmatprep.subr.mxu0 0.0
    %133 = vmatpush1.msra.mxu0 0.0
    %134 = vmatprep.subr.mxu0 0.0
    %135 = vmatpush1.msra.mxu0 0.0
    %136 = vmatprep.subr.mxu0 0.0
    %137 = vmatpush1.msra.mxu0 0.0
    %138 = vmatprep.subr.mxu0 0.0
    %139 = vmatpush1.msra.mxu0 0.0
    %140 = vmatprep.subr.mxu0 0.0
    %141 = vmatpush1.msra.mxu0 0.0
    %142 = vmatprep.subr.mxu0 0.0
    %143 = vmatpush1.msra.mxu0 0.0
    %144 = vmatprep.subr.mxu0 0.0
    %145 = vmatpush1.msra.mxu0 0.0
    %146 = vmatprep.subr.mxu0 0.0
    %147 = vmatpush1.msra.mxu0 0.0
    %148 = vmatprep.subr.mxu0 0.0
    %149 = vmatpush1.msra.mxu0 0.0
    %150 = vmatprep.subr.mxu0 0.0
    %151 = vmatpush1.msra.mxu0 0.0
    %152 = vmatprep.subr.mxu0 0.0
    %153 = vmatpush1.msra.mxu0 0.0
    %154 = vmatprep.subr.mxu0 0.0
    %155 = vmatpush1.msra.mxu0 0.0
    %156 = vmatprep.subr.mxu0 0.0
    %157 = vmatpush1.msra.mxu0 0.0
    %158 = vmatprep.subr.mxu0 0.0
    %159 = vmatpush1.msra.mxu0 0.0
    %160 = vmatprep.subr.mxu0 0.0
    %161 = vmatpush1.msra.mxu0 0.0
    %162 = vmatprep.subr.mxu0 0.0
    %163 = vmatpush1.msra.mxu0 0.0
    %164 = vmatprep.subr.mxu0 0.0
    %165 = vmatpush1.msra.mxu0 0.0
    %166 = vmatprep.subr.mxu0 0.0
    %167 = vmatpush1.msra.mxu0 0.0
    %168 = vmatprep.subr.mxu0 0.0
    %169 = vmatpush1.msra.mxu0 0.0
    %170 = vmatprep.subr.mxu0 0.0
    %171 = vmatpush1.msra.mxu0 0.0
    %172 = vmatprep.subr.mxu0 0.0
    %173 = vmatpush1.msra.mxu0 0.0
    %174 = vmatprep.subr.mxu0 0.0
    %175 = vmatpush1.msra.mxu0 0.0
    %176 = vmatprep.subr.mxu0 0.0
    %177 = vmatpush1.msra.mxu0 0.0
    %178 = vmatprep.subr.mxu0 0.0
    %179 = vmatpush1.msra.mxu0 0.0
    %180 = vmatprep.subr.mxu0 0.0
    %181 = vmatpush1.msra.mxu0 0.0
    %182 = vmatprep.mubr.f32.mxu0 0.0
    %183 = vmatmul.mubr.f32.gmra.mrb[0].mxu0 %v116
    %v184 = vpop.f32.mrb[0].mxu0
    %v185 = vadd.f32 %v112, %v184
    %v186 = vpop.f32.mrb[0].mxu0
    %187 = vdwg.mxu0
    %v188 = vlaneseq
    %v189 = vshrl.u32 %v188, 7
    %v190 = vsub.s32 0, %v189
    %v191 = vrot.slane %v30, %v190
    %v192 = vadd.f32 %v185, %v191
    %v193 = vmax.f32 %v192, 0.0
    %v194 = vld [vmem:[%s4] sm:$0xff]
    %v195 = vld [vmem:[%s4 + $0x8] sm:$0xff]
    %v196 = vld [vmem:[%s4 + $0x10] sm:$0xff]
    %v197 = vld [vmem:[%s4 + $0x18] sm:$0xff]
    %v198 = vld [vmem:[%s4 + $0x20] sm:$0xff]
    %v199 = vld [vmem:[%s4 + $0x28] sm:$0xff]
    %v200 = vld [vmem:[%s4 + $0x30] sm:$0xff]
    %v201 = vld [vmem:[%s4 + $0x38] sm:$0xff]
    %v202 = vlaneseq
    %v203 = vshrl.u32 %v202, 7
    %v204 = vsub.s32 1, %v203
    %v205 = vrot.slane %v30, %v204
    %vm206 = vcmask 523264
    %v208 = vsel %vm206, %v193, 0
    %210 = vmatprep.subr.mxu0 0.0
    %211 = vmatpush1.msra.mxu0 %v194
    %212 = vmatprep.subr.mxu0 0.0
    %213 = vmatpush1.msra.mxu0 %v195
    %214 = vmatprep.subr.mxu0 0.0
    %215 = vmatpush1.msra.mxu0 %v196
    %216 = vmatprep.subr.mxu0 0.0
    %217 = vmatpush1.msra.mxu0 %v197
    %218 = vmatprep.subr.mxu0 0.0
    %219 = vmatpush1.msra.mxu0 %v198
    %220 = vmatprep.subr.mxu0 0.0
    %221 = vmatpush1.msra.mxu0 %v199
    %222 = vmatprep.subr.mxu0 0.0
    %223 = vmatpush1.msra.mxu0 %v200
    %224 = vmatprep.subr.mxu0 0.0
    %225 = vmatpush1.msra.mxu0 %v201
    %226 = vmatprep.subr.mxu0 0.0
    %227 = vmatpush1.msra.mxu0 0.0
    %228 = vmatprep.subr.mxu0 0.0
    %229 = vmatpush1.msra.mxu0 0.0
    %230 = vmatprep.subr.mxu0 0.0
    %231 = vmatpush1.msra.mxu0 0.0
    %232 = vmatprep.subr.mxu0 0.0
    %233 = vmatpush1.msra.mxu0 0.0
    %234 = vmatprep.subr.mxu0 0.0
    %235 = vmatpush1.msra.mxu0 0.0
    %236 = vmatprep.subr.mxu0 0.0
    %237 = vmatpush1.msra.mxu0 0.0
    %238 = vmatprep.subr.mxu0 0.0
    %239 = vmatpush1.msra.mxu0 0.0
    %240 = vmatprep.subr.mxu0 0.0
    %241 = vmatpush1.msra.mxu0 0.0
    %242 = vmatprep.subr.mxu0 0.0
    %243 = vmatpush1.msra.mxu0 0.0
    %244 = vmatprep.subr.mxu0 0.0
    %245 = vmatpush1.msra.mxu0 0.0
    %246 = vmatprep.subr.mxu0 0.0
    %247 = vmatpush1.msra.mxu0 0.0
    %248 = vmatprep.subr.mxu0 0.0
    %249 = vmatpush1.msra.mxu0 0.0
    %250 = vmatprep.subr.mxu0 0.0
    %251 = vmatpush1.msra.mxu0 0.0
    %252 = vmatprep.subr.mxu0 0.0
    %253 = vmatpush1.msra.mxu0 0.0
    %254 = vmatprep.subr.mxu0 0.0
    %255 = vmatpush1.msra.mxu0 0.0
    %256 = vmatprep.subr.mxu0 0.0
    %257 = vmatpush1.msra.mxu0 0.0
    %258 = vmatprep.subr.mxu0 0.0
    %259 = vmatpush1.msra.mxu0 0.0
    %260 = vmatprep.subr.mxu0 0.0
    %261 = vmatpush1.msra.mxu0 0.0
    %262 = vmatprep.subr.mxu0 0.0
    %263 = vmatpush1.msra.mxu0 0.0
    %264 = vmatprep.subr.mxu0 0.0
    %265 = vmatpush1.msra.mxu0 0.0
    %266 = vmatprep.subr.mxu0 0.0
    %267 = vmatpush1.msra.mxu0 0.0
    %268 = vmatprep.subr.mxu0 0.0
    %269 = vmatpush1.msra.mxu0 0.0
    %270 = vmatprep.subr.mxu0 0.0
    %271 = vmatpush1.msra.mxu0 0.0
    %272 = vmatprep.subr.mxu0 0.0
    %273 = vmatpush1.msra.mxu0 0.0
    %274 = vmatprep.mubr.f32.mxu0 0.0
    %275 = vmatmul.mubr.f32.gmra.mrb[0].mxu0 %v208
    %v276 = vpop.f32.mrb[0].mxu0
    %v277 = vadd.f32 %v205, %v276
    %v278 = vpop.f32.mrb[0].mxu0
    %279 = vdwg.mxu0
    %v280 = vmax.f32 %v277, 0.0
    %v281 = vld [vmem:[%s5] sm:$0xff]
    %v282 = vld [vmem:[%s5 + $0x8] sm:$0xff]
    %v283 = vld [vmem:[%s5 + $0x10] sm:$0xff]
    %v284 = vld [vmem:[%s5 + $0x18] sm:$0xff]
    %v285 = vlaneseq
    %v286 = vshrl.u32 %v285, 7
    %v287 = vsub.s32 2, %v286
    %v288 = vrot.slane %v30, %v287
    %v290 = vsel %vm41, %v280, 0
    %292 = vmatprep.subr.mxu0 0.0
    %293 = vmatpush1.msra.mxu0 %v281
    %294 = vmatprep.subr.mxu0 0.0
    %295 = vmatpush1.msra.mxu0 %v282
    %296 = vmatprep.subr.mxu0 0.0
    %297 = vmatpush1.msra.mxu0 %v283
    %298 = vmatprep.subr.mxu0 0.0
    %299 = vmatpush1.msra.mxu0 %v284
    %300 = vmatprep.subr.mxu0 0.0
    %301 = vmatpush1.msra.mxu0 0.0
    %302 = vmatprep.subr.mxu0 0.0
    %303 = vmatpush1.msra.mxu0 0.0
    %304 = vmatprep.subr.mxu0 0.0
    %305 = vmatpush1.msra.mxu0 0.0
    %306 = vmatprep.subr.mxu0 0.0
    %307 = vmatpush1.msra.mxu0 0.0
    %308 = vmatprep.subr.mxu0 0.0
    %309 = vmatpush1.msra.mxu0 0.0
    %310 = vmatprep.subr.mxu0 0.0
    %311 = vmatpush1.msra.mxu0 0.0
    %312 = vmatprep.subr.mxu0 0.0
    %313 = vmatpush1.msra.mxu0 0.0
    %314 = vmatprep.subr.mxu0 0.0
    %315 = vmatpush1.msra.mxu0 0.0
    %316 = vmatprep.subr.mxu0 0.0
    %317 = vmatpush1.msra.mxu0 0.0
    %318 = vmatprep.subr.mxu0 0.0
    %319 = vmatpush1.msra.mxu0 0.0
    %320 = vmatprep.subr.mxu0 0.0
    %321 = vmatpush1.msra.mxu0 0.0
    %322 = vmatprep.subr.mxu0 0.0
    %323 = vmatpush1.msra.mxu0 0.0
    %324 = vmatprep.subr.mxu0 0.0
    %325 = vmatpush1.msra.mxu0 0.0
    %326 = vmatprep.subr.mxu0 0.0
    %327 = vmatpush1.msra.mxu0 0.0
    %328 = vmatprep.subr.mxu0 0.0
    %329 = vmatpush1.msra.mxu0 0.0
    %330 = vmatprep.subr.mxu0 0.0
    %331 = vmatpush1.msra.mxu0 0.0
    %332 = vmatprep.subr.mxu0 0.0
    %333 = vmatpush1.msra.mxu0 0.0
    %334 = vmatprep.subr.mxu0 0.0
    %335 = vmatpush1.msra.mxu0 0.0
    %336 = vmatprep.subr.mxu0 0.0
    %337 = vmatpush1.msra.mxu0 0.0
    %338 = vmatprep.subr.mxu0 0.0
    %339 = vmatpush1.msra.mxu0 0.0
    %340 = vmatprep.subr.mxu0 0.0
    %341 = vmatpush1.msra.mxu0 0.0
    %342 = vmatprep.subr.mxu0 0.0
    %343 = vmatpush1.msra.mxu0 0.0
    %344 = vmatprep.subr.mxu0 0.0
    %345 = vmatpush1.msra.mxu0 0.0
    %346 = vmatprep.subr.mxu0 0.0
    %347 = vmatpush1.msra.mxu0 0.0
    %348 = vmatprep.subr.mxu0 0.0
    %349 = vmatpush1.msra.mxu0 0.0
    %350 = vmatprep.subr.mxu0 0.0
    %351 = vmatpush1.msra.mxu0 0.0
    %352 = vmatprep.subr.mxu0 0.0
    %353 = vmatpush1.msra.mxu0 0.0
    %354 = vmatprep.subr.mxu0 0.0
    %355 = vmatpush1.msra.mxu0 0.0
    %356 = vmatprep.mubr.f32.mxu0 0.0
    %357 = vmatmul.mubr.f32.gmra.mrb[0].mxu0 %v290
    %v358 = vpop.f32.mrb[0].mxu0
    %v359 = vadd.f32 %v288, %v358
    %v360 = vpop.f32.mrb[0].mxu0
    %361 = vdwg.mxu0
    %v362 = vmax.f32 %v359, 0.0
    %v363 = vld [vmem:[%s6] sm:$0xff]
    %v364 = vld [vmem:[%s6 + $0x8] sm:$0xff]
    %v365 = vlaneseq
    %v366 = vshrl.u32 %v365, 7
    %v367 = vsub.s32 3, %v366
    %v368 = vrot.slane %v30, %v367
    %vm369 = vcmask 130048
    %v371 = vsel %vm369, %v362, 0
    %373 = vmatprep.subr.mxu0 0.0
    %374 = vmatpush1.msra.mxu0 %v363
    %375 = vmatprep.subr.mxu0 0.0
    %376 = vmatpush1.msra.mxu0 %v364
    %377 = vmatprep.subr.mxu0 0.0
    %378 = vmatpush1.msra.mxu0 0.0
    %379 = vmatprep.subr.mxu0 0.0
    %380 = vmatpush1.msra.mxu0 0.0
    %381 = vmatprep.subr.mxu0 0.0
    %382 = vmatpush1.msra.mxu0 0.0
    %383 = vmatprep.subr.mxu0 0.0
    %384 = vmatpush1.msra.mxu0 0.0
    %385 = vmatprep.subr.mxu0 0.0
    %386 = vmatpush1.msra.mxu0 0.0
    %387 = vmatprep.subr.mxu0 0.0
    %388 = vmatpush1.msra.mxu0 0.0
    %389 = vmatprep.subr.mxu0 0.0
    %390 = vmatpush1.msra.mxu0 0.0
    %391 = vmatprep.subr.mxu0 0.0
    %392 = vmatpush1.msra.mxu0 0.0
    %393 = vmatprep.subr.mxu0 0.0
    %394 = vmatpush1.msra.mxu0 0.0
    %395 = vmatprep.subr.mxu0 0.0
    %396 = vmatpush1.msra.mxu0 0.0
    %397 = vmatprep.subr.mxu0 0.0
    %398 = vmatpush1.msra.mxu0 0.0
    %399 = vmatprep.subr.mxu0 0.0
    %400 = vmatpush1.msra.mxu0 0.0
    %401 = vmatprep.subr.mxu0 0.0
    %402 = vmatpush1.msra.mxu0 0.0
    %403 = vmatprep.subr.mxu0 0.0
    %404 = vmatpush1.msra.mxu0 0.0
    %405 = vmatprep.subr.mxu0 0.0
    %406 = vmatpush1.msra.mxu0 0.0
    %407 = vmatprep.subr.mxu0 0.0
    %408 = vmatpush1.msra.mxu0 0.0
    %409 = vmatprep.subr.mxu0 0.0
    %410 = vmatpush1.msra.mxu0 0.0
    %411 = vmatprep.subr.mxu0 0.0
    %412 = vmatpush1.msra.mxu0 0.0
    %413 = vmatprep.subr.mxu0 0.0
    %414 = vmatpush1.msra.mxu0 0.0
    %415 = vmatprep.subr.mxu0 0.0
    %416 = vmatpush1.msra.mxu0 0.0
    %417 = vmatprep.subr.mxu0 0.0
    %418 = vmatpush1.msra.mxu0 0.0
    %419 = vmatprep.subr.mxu0 0.0
    %420 = vmatpush1.msra.mxu0 0.0
    %421 = vmatprep.subr.mxu0 0.0
    %422 = vmatpush1.msra.mxu0 0.0
    %423 = vmatprep.subr.mxu0 0.0
    %424 = vmatpush1.msra.mxu0 0.0
    %425 = vmatprep.subr.mxu0 0.0
    %426 = vmatpush1.msra.mxu0 0.0
    %427 = vmatprep.subr.mxu0 0.0
    %428 = vmatpush1.msra.mxu0 0.0
    %429 = vmatprep.subr.mxu0 0.0
    %430 = vmatpush1.msra.mxu0 0.0
    %431 = vmatprep.subr.mxu0 0.0
    %432 = vmatpush1.msra.mxu0 0.0
    %433 = vmatprep.subr.mxu0 0.0
    %434 = vmatpush1.msra.mxu0 0.0
    %435 = vmatprep.subr.mxu0 0.0
    %436 = vmatpush1.msra.mxu0 0.0
    %437 = vmatprep.mubr.f32.mxu0 0.0
    %438 = vmatmul.mubr.f32.gmra.mrb[0].mxu0 %v371
    %v439 = vpop.f32.mrb[0].mxu0
    %v440 = vadd.f32 %v368, %v439
    %v441 = vpop.f32.mrb[0].mxu0
    %442 = vdwg.mxu0
    %v443 = vxor.u32 %v440, 2147483648
    %v444 = vmul.f32 %v443, 1.442695
    %v445 = vpow.pop %v444
    %v446 = vadd.f32 %v445, 1.0
    %v447 = vrcp.pop %v446
    %v448 = vmul.f32 1.0, %v447
    %vm449 = vcmask 64512
    %450 = vst.msk [vmem:[#allocation2] sm:$0xff] %vm449, %v448
    // Predicated region
    $region34: #{tpu_custom_call.1} parent=1 // pred_check
      _
    $region35: #{tpu_custom_call.1} parent=1 // pred_check_branch
      %452 = sbr.rel (0) target = $region37
    $region36: #{tpu_custom_call.1} parent=1 // pred_region
      %s454 = ssub.s32 128, 128
      %455 = vsyncadd [#allocation3], %s454
      %s457 = sshll.u32 [#allocation2], 4
      %s458 = int_to_ptr.vmem [resolvable:$true] %s457
      %460 = dma.vmem_to_hbm [thread:$0]  %s458, 128, %s8, [#allocation3]
    $region37: #{tpu_custom_call.1} parent=1 // pred_fallthru
      _
    // Predicated region
    $region38: #{tpu_custom_call.1} parent=1 // pred_check
      _
    $region39: #{tpu_custom_call.1} parent=1 // pred_check_branch
      %462 = sbr.rel (0) target = $region41
    $region40: #{tpu_custom_call.1} parent=1 // pred_region
      %463 = dma.done [#allocation3], 128
    $region41: #{tpu_custom_call.1} parent=1 // pred_fallthru
      _
    %464 = vsyncpa [#allocation3], 1

</llo_original>
